<compile_context>
chip_gen: v5e
topology: v5e:2x2
jax: 0.10.0
libtpu: 0.0.40
codegen_flags: <defaults>
</compile_context>

<pallas_src>
import functools
import math

import jax
import jax.numpy as jnp
from jax.experimental import pallas as pl
from jax.experimental.pallas import tpu as pltpu


def _encoder_kernel(x_ref, ln1g_ref, ln1b_ref,
                    wqkv_ref, bqkv_ref,
                    wo_ref, bo_ref,
                    ln2g_ref, ln2b_ref,
                    w1_ref, b1_ref, w2_ref, b2_ref,
                    o_ref, *, n_heads):
    eps = 1e-5
    f32, bf16 = jnp.float32, jnp.bfloat16
    B, S, D = x_ref.shape
    H = n_heads
    hd = D // H
    N = B * S

    # Flatten batch*seq into one lane-dense row block for all row-wise math.
    x = x_ref[...].astype(f32).reshape(N, D)                      # (N, D) f32

    def layernorm(v, g_ref, b_ref):
        mu = jnp.mean(v, axis=-1, keepdims=True)
        var = jnp.mean((v - mu) ** 2, axis=-1, keepdims=True)
        return (v - mu) * jax.lax.rsqrt(var + eps) * g_ref[...] + b_ref[...]

    # --- LN1 (f32) ---
    a = layernorm(x, ln1g_ref, ln1b_ref)                          # (N, D) f32

    # --- fused QKV: one (N, D) @ (D, 3D) matmul, bf16 operands, f32 accum ---
    # 1/sqrt(hd) is already folded into the q columns of wqkv/bqkv.
    qkv = jnp.dot(a.astype(bf16), wqkv_ref[...],
                  preferred_element_type=f32) + bqkv_ref[...]     # (N, 3D) f32
    qkv_b = qkv.astype(bf16).reshape(B, S, 3 * D)                 # (B, S, 3D) bf16

    # --- scaled dot-product attention (per-head static lane slices) ---
    head_outs = []
    for h in range(H):
        q_h = qkv_b[:, :, h * hd:(h + 1) * hd]                    # (B, S, hd)
        k_h = qkv_b[:, :, D + h * hd:D + (h + 1) * hd]
        v_h = qkv_b[:, :, 2 * D + h * hd:2 * D + (h + 1) * hd]
        s = jnp.einsum('bqf,bkf->bqk', q_h, k_h,
                       preferred_element_type=f32)                # (B, S, S) f32
        s = s - jnp.max(s, axis=-1, keepdims=True)
        p = jnp.exp(s)
        p = p * pl.reciprocal(jnp.sum(p, axis=-1, keepdims=True), approx=True)
        head_outs.append(
            jnp.einsum('bqk,bkf->bqf', p.astype(bf16), v_h,
                       preferred_element_type=f32))               # (B, S, hd) f32

    # --- concat heads -> lane-dense (N, D), single output projection (K = D) ---
    heads = jnp.concatenate(head_outs, axis=-1).reshape(N, D)     # (N, D) f32
    attn = jnp.dot(heads.astype(bf16), wo_ref[...],
                   preferred_element_type=f32) + bo_ref[...]      # (N, D) f32

    # --- residual + LN2 (f32) ---
    x2 = layernorm(attn + x, ln2g_ref, ln2b_ref)                  # (N, D) f32

    # --- FFN + residual (bf16 MXU operands, f32 accumulation) ---
    h1 = jnp.maximum(
        jnp.dot(x2.astype(bf16), w1_ref[...],
                preferred_element_type=f32) + b1_ref[...], 0.0)
    ffn = jnp.dot(h1.astype(bf16), w2_ref[...],
                  preferred_element_type=f32) + b2_ref[...]

    o_ref[...] = (x2 + ffn).reshape(B, S, D).astype(o_ref.dtype)


def encoder_forward(x, params, n_heads):
    B, S, D = x.shape
    hd = D // n_heads
    scale = 1.0 / math.sqrt(hd)
    f32, bf16 = jnp.float32, jnp.bfloat16

    # Host-side (trace-time) weight prep: fused lane-dense (D, 3D) QKV slab
    # (scale folded into the q columns), plain lane-dense (D, D) Wo, bf16 cast
    # for all matmul weights (halves weight VMEM / HBM traffic).
    wqkv = jnp.concatenate(
        [params["wq_t"] * scale, params["wk_t"], params["wv_t"]],
        axis=1).astype(bf16)                                       # (D, 3D)
    bqkv = jnp.concatenate(
        [params["bq"] * scale, params["bk"], params["bv"]],
        axis=1).astype(f32)                                        # (1, 3D)

    param_list = [
        params["ln1_g"].astype(f32), params["ln1_b"].astype(f32),
        wqkv, bqkv,
        params["wo_t"].astype(bf16), params["bo"].astype(f32),
        params["ln2_g"].astype(f32), params["ln2_b"].astype(f32),
        params["w1_t"].astype(bf16), params["b1"].astype(f32),
        params["w2_t"].astype(bf16), params["b2"].astype(f32),
    ]

    # VMEM budget from the actual footprint (inputs + outputs + attention
    # intermediates), clamped to stay inside every chip's physical VMEM.
    arg_bytes = x.size * x.dtype.itemsize + sum(
        int(p.size) * p.dtype.itemsize for p in param_list)
    out_bytes = B * S * D * x.dtype.itemsize
    score_bytes = B * S * S * 4                                    # per-head f32 scores
    vmem_limit = int(min(64 * 2**20,
                         max(8 * 2**20, 4 * (arg_bytes + out_bytes + score_bytes))))

    def full_spec(shape):
        nd = len(shape)
        return pl.BlockSpec(shape, lambda b: (0,) * nd)

    # Whole batch in ONE grid step (B, S, D tiny here): removes per-step grid
    # overhead and gives the MXU a (B*S, D) operand instead of (S, D).
    in_specs = [pl.BlockSpec((B, S, D), lambda b: (0, 0, 0))]
    in_specs += [full_spec(p.shape) for p in param_list]

    kernel = functools.partial(_encoder_kernel, n_heads=n_heads)
    return pl.pallas_call(
        kernel,
        out_shape=jax.ShapeDtypeStruct((B, S, D), x.dtype),
        grid=(1,),
        in_specs=in_specs,
        out_specs=pl.BlockSpec((B, S, D), lambda b: (0, 0, 0)),
        compiler_params=pltpu.CompilerParams(
            dimension_semantics=("parallel",),
            vmem_limit_bytes=vmem_limit),
    )(x, *param_list)


def encoder_reference(x, params, n_heads):
    """Plain-JAX f32 reference (mirrors PyTorch semantics) for verification."""
    eps = 1e-5
    D = x.shape[-1]
    hd = D // n_heads

    def ln(v, g, b):
        mu = jnp.mean(v, axis=-1, keepdims=True)
        var = jnp.mean((v - mu) ** 2, axis=-1, keepdims=True)
        return (v - mu) / jnp.sqrt(var + eps) * g[0] + b[0]

    a = ln(x, params["ln1_g"], params["ln1_b"])
    q = a @ params["wq_t"] + params["bq"][0]
    k = a @ params["wk_t"] + params["bk"][0]
    v = a @ params["wv_t"] + params["bv"][0]
    B, S, _ = x.shape
    qh = q.reshape(B, S, n_heads, hd).transpose(0, 2, 1, 3)
    kh = k.reshape(B, S, n_heads, hd).transpose(0, 2, 1, 3)
    vh = v.reshape(B, S, n_heads, hd).transpose(0, 2, 1, 3)
    s = jnp.einsum("bhqd,bhkd->bhqk", qh, kh) / math.sqrt(hd)
    p = jax.nn.softmax(s, axis=-1)
    o = jnp.einsum("bhqk,bhkd->bhqd", p, vh).transpose(0, 2, 1, 3).reshape(B, S, D)
    attn = o @ params["wo_t"] + params["bo"][0]
    x2 = ln(attn + x, params["ln2_g"], params["ln2_b"])
    ffn = jnp.maximum(x2 @ params["w1_t"] + params["b1"][0], 0.0) @ params["w2_t"] + params["b2"][0]
    return x2 + ffn


def make_params(key, dimv):
    ks = jax.random.split(key, 12)
    f32 = jnp.float32
    return {
        "ln1_g": jnp.ones((1, dimv), f32),
        "ln1_b": jnp.zeros((1, dimv), f32),
        "wq_t": 0.1 * jax.random.normal(ks[0], (dimv, dimv), f32),
        "wk_t": 0.1 * jax.random.normal(ks[1], (dimv, dimv), f32),
        "wv_t": 0.1 * jax.random.normal(ks[2], (dimv, dimv), f32),
        "bq": 0.01 * jax.random.normal(ks[3], (1, dimv), f32),
        "bk": 0.01 * jax.random.normal(ks[4], (1, dimv), f32),
        "bv": 0.01 * jax.random.normal(ks[5], (1, dimv), f32),
        "wo_t": 0.1 * jax.random.normal(ks[6], (dimv, dimv), f32),
        "bo": 0.01 * jax.random.normal(ks[7], (1, dimv), f32),
        "ln2_g": jnp.ones((1, dimv), f32),
        "ln2_b": jnp.zeros((1, dimv), f32),
        "w1_t": 0.1 * jax.random.normal(ks[8], (dimv, dimv), f32),
        "b1": 0.01 * jax.random.normal(ks[9], (1, dimv), f32),
        "w2_t": 0.1 * jax.random.normal(ks[10], (dimv, dimv), f32),
        "b2": 0.01 * jax.random.normal(ks[11], (1, dimv), f32),
    }


if __name__ == "__main__":
    B, S, DIMV, N_HEADS = 2, 8, 32, 4  # dimv == dimatt == 32
    key = jax.random.PRNGKey(0)
    kx, kp = jax.random.split(key)
    x = jax.random.normal(kx, (B, S, DIMV), jnp.float32)
    params = make_params(kp, DIMV)

    out = encoder_forward(x, params, N_HEADS)
    out = jax.block_until_ready(out)

    ref = encoder_reference(x, params, N_HEADS)
    assert out.shape == (B, S, DIMV)
    # Looser tolerance: MXU operands are bf16 (accumulation stays f32).
    assert jnp.allclose(out, ref, atol=5e-2, rtol=5e-2)
    print("KERNEL_OK")
</pallas_src>

<mosaic_0001>
module attributes {stable_mosaic.version = 11 : i64} {
  func.func @_encoder_kernel(%arg0: i32, %arg1: memref<2x8x32xf32, #tpu.memory_space<vmem>>, %arg2: memref<1x32xf32, #tpu.memory_space<vmem>>, %arg3: memref<1x32xf32, #tpu.memory_space<vmem>>, %arg4: memref<32x96xbf16, #tpu.memory_space<vmem>>, %arg5: memref<1x96xf32, #tpu.memory_space<vmem>>, %arg6: memref<32x32xbf16, #tpu.memory_space<vmem>>, %arg7: memref<1x32xf32, #tpu.memory_space<vmem>>, %arg8: memref<1x32xf32, #tpu.memory_space<vmem>>, %arg9: memref<1x32xf32, #tpu.memory_space<vmem>>, %arg10: memref<32x32xbf16, #tpu.memory_space<vmem>>, %arg11: memref<1x32xf32, #tpu.memory_space<vmem>>, %arg12: memref<32x32xbf16, #tpu.memory_space<vmem>>, %arg13: memref<1x32xf32, #tpu.memory_space<vmem>>, %arg14: memref<2x8x32xf32, #tpu.memory_space<vmem>>) attributes {dimension_semantics = [#tpu.dimension_semantics<parallel>], iteration_bounds = array<i64: 1>, scalar_prefetch = 0 : i64, scratch_operands = 0 : i64, tpu.core_type = #tpu.core_type<tc>, window_params = [{pipeline_mode = #tpu.pipeline_mode<synchronous>, transform_indices = @transform_0, window_bounds = array<i64: 2, 8, 32>}, {pipeline_mode = #tpu.pipeline_mode<synchronous>, transform_indices = @transform_1, window_bounds = array<i64: 1, 32>}, {pipeline_mode = #tpu.pipeline_mode<synchronous>, transform_indices = @transform_2, window_bounds = array<i64: 1, 32>}, {pipeline_mode = #tpu.pipeline_mode<synchronous>, transform_indices = @transform_3, window_bounds = array<i64: 32, 96>}, {pipeline_mode = #tpu.pipeline_mode<synchronous>, transform_indices = @transform_4, window_bounds = array<i64: 1, 96>}, {pipeline_mode = #tpu.pipeline_mode<synchronous>, transform_indices = @transform_5, window_bounds = array<i64: 32, 32>}, {pipeline_mode = #tpu.pipeline_mode<synchronous>, transform_indices = @transform_6, window_bounds = array<i64: 1, 32>}, {pipeline_mode = #tpu.pipeline_mode<synchronous>, transform_indices = @transform_7, window_bounds = array<i64: 1, 32>}, {pipeline_mode = #tpu.pipeline_mode<synchronous>, transform_indices = @transform_8, window_bounds = array<i64: 1, 32>}, {pipeline_mode = #tpu.pipeline_mode<synchronous>, transform_indices = @transform_9, window_bounds = array<i64: 32, 32>}, {pipeline_mode = #tpu.pipeline_mode<synchronous>, transform_indices = @transform_10, window_bounds = array<i64: 1, 32>}, {pipeline_mode = #tpu.pipeline_mode<synchronous>, transform_indices = @transform_11, window_bounds = array<i64: 32, 32>}, {pipeline_mode = #tpu.pipeline_mode<synchronous>, transform_indices = @transform_12, window_bounds = array<i64: 1, 32>}, {pipeline_mode = #tpu.pipeline_mode<synchronous>, transform_indices = @transform_13, window_bounds = array<i64: 2, 8, 32>}]} {
    %c0 = arith.constant 0 : index
    %c0_0 = arith.constant 0 : index
    %c0_1 = arith.constant 0 : index
    %0 = vector.load %arg1[%c0, %c0_0, %c0_1] : memref<2x8x32xf32, #tpu.memory_space<vmem>>, vector<2x8x32xf32>
    %1 = vector.shape_cast %0 : vector<2x8x32xf32> to vector<16x32xf32>
    %cst = arith.constant dense<0.000000e+00> : vector<16xf32>
    %2 = vector.multi_reduction <add>, %1, %cst [1] : vector<16x32xf32> to vector<16xf32>
    %3 = vector.shape_cast %2 : vector<16xf32> to vector<16x1xf32>
    %cst_2 = arith.constant 3.200000e+01 : f32
    %4 = vector.broadcast %cst_2 : f32 to vector<16x1xf32>
    %5 = arith.divf %3, %4 : vector<16x1xf32>
    %6 = vector.broadcast %5 : vector<16x1xf32> to vector<16x32xf32>
    %7 = arith.subf %1, %6 : vector<16x32xf32>
    %8 = arith.mulf %7, %7 : vector<16x32xf32>
    %cst_3 = arith.constant dense<0.000000e+00> : vector<16xf32>
    %9 = vector.multi_reduction <add>, %8, %cst_3 [1] : vector<16x32xf32> to vector<16xf32>
    %10 = vector.shape_cast %9 : vector<16xf32> to vector<16x1xf32>
    %cst_4 = arith.constant 3.200000e+01 : f32
    %11 = vector.broadcast %cst_4 : f32 to vector<16x1xf32>
    %12 = arith.divf %10, %11 : vector<16x1xf32>
    %13 = vector.broadcast %5 : vector<16x1xf32> to vector<16x32xf32>
    %14 = arith.subf %1, %13 : vector<16x32xf32>
    %cst_5 = arith.constant 9.99999974E-6 : f32
    %15 = vector.broadcast %cst_5 : f32 to vector<16x1xf32>
    %16 = arith.addf %12, %15 : vector<16x1xf32>
    %17 = math.rsqrt %16 : vector<16x1xf32>
    %18 = vector.broadcast %17 : vector<16x1xf32> to vector<16x32xf32>
    %19 = arith.mulf %14, %18 : vector<16x32xf32>
    %c0_6 = arith.constant 0 : index
    %c0_7 = arith.constant 0 : index
    %20 = vector.load %arg2[%c0_6, %c0_7] : memref<1x32xf32, #tpu.memory_space<vmem>>, vector<1x32xf32>
    %21 = vector.broadcast %20 : vector<1x32xf32> to vector<16x32xf32>
    %22 = arith.mulf %19, %21 : vector<16x32xf32>
    %c0_8 = arith.constant 0 : index
    %c0_9 = arith.constant 0 : index
    %23 = vector.load %arg3[%c0_8, %c0_9] : memref<1x32xf32, #tpu.memory_space<vmem>>, vector<1x32xf32>
    %24 = vector.broadcast %23 : vector<1x32xf32> to vector<16x32xf32>
    %25 = arith.addf %22, %24 : vector<16x32xf32>
    %26 = arith.truncf %25 : vector<16x32xf32> to vector<16x32xbf16>
    %c0_10 = arith.constant 0 : index
    %c0_11 = arith.constant 0 : index
    %27 = vector.load %arg4[%c0_10, %c0_11] : memref<32x96xbf16, #tpu.memory_space<vmem>>, vector<32x96xbf16>
    %cst_12 = arith.constant dense<0.000000e+00> : vector<16x96xf32>
    %28 = tpu.matmul %26, %27, %cst_12 {dimension_numbers = #tpu.dot_dimension_numbers<[1], [0], [0], [1], [0, 0, 1, 1], [], []>} : vector<16x32xbf16>, vector<32x96xbf16>, vector<16x96xf32> -> vector<16x96xf32>
    %c0_13 = arith.constant 0 : index
    %c0_14 = arith.constant 0 : index
    %29 = vector.load %arg5[%c0_13, %c0_14] : memref<1x96xf32, #tpu.memory_space<vmem>>, vector<1x96xf32>
    %30 = vector.broadcast %29 : vector<1x96xf32> to vector<16x96xf32>
    %31 = arith.addf %28, %30 : vector<16x96xf32>
    %32 = arith.truncf %31 : vector<16x96xf32> to vector<16x96xbf16>
    %33 = vector.shape_cast %32 : vector<16x96xbf16> to vector<2x8x96xbf16>
    %34 = vector.extract_strided_slice %33 {offsets = [0, 0, 0], sizes = [2, 8, 8], strides = [1, 1, 1]} : vector<2x8x96xbf16> to vector<2x8x8xbf16>
    %35 = vector.extract_strided_slice %33 {offsets = [0, 0, 32], sizes = [2, 8, 8], strides = [1, 1, 1]} : vector<2x8x96xbf16> to vector<2x8x8xbf16>
    %36 = vector.extract_strided_slice %33 {offsets = [0, 0, 64], sizes = [2, 8, 8], strides = [1, 1, 1]} : vector<2x8x96xbf16> to vector<2x8x8xbf16>
    "tpu.trace_start"() <{level = 10 : i32, message = "bqf,bkf->bqk"}> : () -> ()
    %cst_15 = arith.constant dense<0.000000e+00> : vector<2x8x8xf32>
    %37 = tpu.matmul %34, %35, %cst_15 {dimension_numbers = #tpu.dot_dimension_numbers<[2], [2], [1], [1], [0, 0, 0, 1, 1, 1], [0], [0]>} : vector<2x8x8xbf16>, vector<2x8x8xbf16>, vector<2x8x8xf32> -> vector<2x8x8xf32>
    "tpu.trace_stop"() : () -> ()
    %cst_16 = arith.constant dense<0xFF800000> : vector<2x8xf32>
    %38 = vector.multi_reduction <maximumf>, %37, %cst_16 [2] : vector<2x8x8xf32> to vector<2x8xf32>
    %39 = vector.shape_cast %38 : vector<2x8xf32> to vector<2x8x1xf32>
    %40 = vector.broadcast %39 : vector<2x8x1xf32> to vector<2x8x8xf32>
    %41 = arith.subf %37, %40 : vector<2x8x8xf32>
    %42 = math.exp %41 : vector<2x8x8xf32>
    %cst_17 = arith.constant dense<0.000000e+00> : vector<2x8xf32>
    %43 = vector.multi_reduction <add>, %42, %cst_17 [2] : vector<2x8x8xf32> to vector<2x8xf32>
    %44 = vector.shape_cast %43 : vector<2x8xf32> to vector<2x8x1xf32>
    %45 = tpu.reciprocal %44 {approx = true} : vector<2x8x1xf32> -> vector<2x8x1xf32>
    %46 = vector.broadcast %45 : vector<2x8x1xf32> to vector<2x8x8xf32>
    %47 = arith.mulf %42, %46 : vector<2x8x8xf32>
    %48 = arith.truncf %47 : vector<2x8x8xf32> to vector<2x8x8xbf16>
    "tpu.trace_start"() <{level = 10 : i32, message = "bqk,bkf->bqf"}> : () -> ()
    %cst_18 = arith.constant dense<0.000000e+00> : vector<2x8x8xf32>
    %49 = tpu.matmul %48, %36, %cst_18 {dimension_numbers = #tpu.dot_dimension_numbers<[2], [1], [1], [2], [0, 0, 0, 1, 1, 2], [0], [0]>} : vector<2x8x8xbf16>, vector<2x8x8xbf16>, vector<2x8x8xf32> -> vector<2x8x8xf32>
    "tpu.trace_stop"() : () -> ()
    %50 = vector.extract_strided_slice %33 {offsets = [0, 0, 8], sizes = [2, 8, 8], strides = [1, 1, 1]} : vector<2x8x96xbf16> to vector<2x8x8xbf16>
    %51 = vector.extract_strided_slice %33 {offsets = [0, 0, 40], sizes = [2, 8, 8], strides = [1, 1, 1]} : vector<2x8x96xbf16> to vector<2x8x8xbf16>
    %52 = vector.extract_strided_slice %33 {offsets = [0, 0, 72], sizes = [2, 8, 8], strides = [1, 1, 1]} : vector<2x8x96xbf16> to vector<2x8x8xbf16>
    "tpu.trace_start"() <{level = 10 : i32, message = "bqf,bkf->bqk"}> : () -> ()
    %cst_19 = arith.constant dense<0.000000e+00> : vector<2x8x8xf32>
    %53 = tpu.matmul %50, %51, %cst_19 {dimension_numbers = #tpu.dot_dimension_numbers<[2], [2], [1], [1], [0, 0, 0, 1, 1, 1], [0], [0]>} : vector<2x8x8xbf16>, vector<2x8x8xbf16>, vector<2x8x8xf32> -> vector<2x8x8xf32>
    "tpu.trace_stop"() : () -> ()
    %cst_20 = arith.constant dense<0xFF800000> : vector<2x8xf32>
    %54 = vector.multi_reduction <maximumf>, %53, %cst_20 [2] : vector<2x8x8xf32> to vector<2x8xf32>
    %55 = vector.shape_cast %54 : vector<2x8xf32> to vector<2x8x1xf32>
    %56 = vector.broadcast %55 : vector<2x8x1xf32> to vector<2x8x8xf32>
    %57 = arith.subf %53, %56 : vector<2x8x8xf32>
    %58 = math.exp %57 : vector<2x8x8xf32>
    %cst_21 = arith.constant dense<0.000000e+00> : vector<2x8xf32>
    %59 = vector.multi_reduction <add>, %58, %cst_21 [2] : vector<2x8x8xf32> to vector<2x8xf32>
    %60 = vector.shape_cast %59 : vector<2x8xf32> to vector<2x8x1xf32>
    %61 = tpu.reciprocal %60 {approx = true} : vector<2x8x1xf32> -> vector<2x8x1xf32>
    %62 = vector.broadcast %61 : vector<2x8x1xf32> to vector<2x8x8xf32>
    %63 = arith.mulf %58, %62 : vector<2x8x8xf32>
    %64 = arith.truncf %63 : vector<2x8x8xf32> to vector<2x8x8xbf16>
    "tpu.trace_start"() <{level = 10 : i32, message = "bqk,bkf->bqf"}> : () -> ()
    %cst_22 = arith.constant dense<0.000000e+00> : vector<2x8x8xf32>
    %65 = tpu.matmul %64, %52, %cst_22 {dimension_numbers = #tpu.dot_dimension_numbers<[2], [1], [1], [2], [0, 0, 0, 1, 1, 2], [0], [0]>} : vector<2x8x8xbf16>, vector<2x8x8xbf16>, vector<2x8x8xf32> -> vector<2x8x8xf32>
    "tpu.trace_stop"() : () -> ()
    %66 = vector.extract_strided_slice %33 {offsets = [0, 0, 16], sizes = [2, 8, 8], strides = [1, 1, 1]} : vector<2x8x96xbf16> to vector<2x8x8xbf16>
    %67 = vector.extract_strided_slice %33 {offsets = [0, 0, 48], sizes = [2, 8, 8], strides = [1, 1, 1]} : vector<2x8x96xbf16> to vector<2x8x8xbf16>
    %68 = vector.extract_strided_slice %33 {offsets = [0, 0, 80], sizes = [2, 8, 8], strides = [1, 1, 1]} : vector<2x8x96xbf16> to vector<2x8x8xbf16>
    "tpu.trace_start"() <{level = 10 : i32, message = "bqf,bkf->bqk"}> : () -> ()
    %cst_23 = arith.constant dense<0.000000e+00> : vector<2x8x8xf32>
    %69 = tpu.matmul %66, %67, %cst_23 {dimension_numbers = #tpu.dot_dimension_numbers<[2], [2], [1], [1], [0, 0, 0, 1, 1, 1], [0], [0]>} : vector<2x8x8xbf16>, vector<2x8x8xbf16>, vector<2x8x8xf32> -> vector<2x8x8xf32>
    "tpu.trace_stop"() : () -> ()
    %cst_24 = arith.constant dense<0xFF800000> : vector<2x8xf32>
    %70 = vector.multi_reduction <maximumf>, %69, %cst_24 [2] : vector<2x8x8xf32> to vector<2x8xf32>
    %71 = vector.shape_cast %70 : vector<2x8xf32> to vector<2x8x1xf32>
    %72 = vector.broadcast %71 : vector<2x8x1xf32> to vector<2x8x8xf32>
    %73 = arith.subf %69, %72 : vector<2x8x8xf32>
    %74 = math.exp %73 : vector<2x8x8xf32>
    %cst_25 = arith.constant dense<0.000000e+00> : vector<2x8xf32>
    %75 = vector.multi_reduction <add>, %74, %cst_25 [2] : vector<2x8x8xf32> to vector<2x8xf32>
    %76 = vector.shape_cast %75 : vector<2x8xf32> to vector<2x8x1xf32>
    %77 = tpu.reciprocal %76 {approx = true} : vector<2x8x1xf32> -> vector<2x8x1xf32>
    %78 = vector.broadcast %77 : vector<2x8x1xf32> to vector<2x8x8xf32>
    %79 = arith.mulf %74, %78 : vector<2x8x8xf32>
    %80 = arith.truncf %79 : vector<2x8x8xf32> to vector<2x8x8xbf16>
    "tpu.trace_start"() <{level = 10 : i32, message = "bqk,bkf->bqf"}> : () -> ()
    %cst_26 = arith.constant dense<0.000000e+00> : vector<2x8x8xf32>
    %81 = tpu.matmul %80, %68, %cst_26 {dimension_numbers = #tpu.dot_dimension_numbers<[2], [1], [1], [2], [0, 0, 0, 1, 1, 2], [0], [0]>} : vector<2x8x8xbf16>, vector<2x8x8xbf16>, vector<2x8x8xf32> -> vector<2x8x8xf32>
    "tpu.trace_stop"() : () -> ()
    %82 = vector.extract_strided_slice %33 {offsets = [0, 0, 24], sizes = [2, 8, 8], strides = [1, 1, 1]} : vector<2x8x96xbf16> to vector<2x8x8xbf16>
    %83 = vector.extract_strided_slice %33 {offsets = [0, 0, 56], sizes = [2, 8, 8], strides = [1, 1, 1]} : vector<2x8x96xbf16> to vector<2x8x8xbf16>
    %84 = vector.extract_strided_slice %33 {offsets = [0, 0, 88], sizes = [2, 8, 8], strides = [1, 1, 1]} : vector<2x8x96xbf16> to vector<2x8x8xbf16>
    "tpu.trace_start"() <{level = 10 : i32, message = "bqf,bkf->bqk"}> : () -> ()
    %cst_27 = arith.constant dense<0.000000e+00> : vector<2x8x8xf32>
    %85 = tpu.matmul %82, %83, %cst_27 {dimension_numbers = #tpu.dot_dimension_numbers<[2], [2], [1], [1], [0, 0, 0, 1, 1, 1], [0], [0]>} : vector<2x8x8xbf16>, vector<2x8x8xbf16>, vector<2x8x8xf32> -> vector<2x8x8xf32>
    "tpu.trace_stop"() : () -> ()
    %cst_28 = arith.constant dense<0xFF800000> : vector<2x8xf32>
    %86 = vector.multi_reduction <maximumf>, %85, %cst_28 [2] : vector<2x8x8xf32> to vector<2x8xf32>
    %87 = vector.shape_cast %86 : vector<2x8xf32> to vector<2x8x1xf32>
    %88 = vector.broadcast %87 : vector<2x8x1xf32> to vector<2x8x8xf32>
    %89 = arith.subf %85, %88 : vector<2x8x8xf32>
    %90 = math.exp %89 : vector<2x8x8xf32>
    %cst_29 = arith.constant dense<0.000000e+00> : vector<2x8xf32>
    %91 = vector.multi_reduction <add>, %90, %cst_29 [2] : vector<2x8x8xf32> to vector<2x8xf32>
    %92 = vector.shape_cast %91 : vector<2x8xf32> to vector<2x8x1xf32>
    %93 = tpu.reciprocal %92 {approx = true} : vector<2x8x1xf32> -> vector<2x8x1xf32>
    %94 = vector.broadcast %93 : vector<2x8x1xf32> to vector<2x8x8xf32>
    %95 = arith.mulf %90, %94 : vector<2x8x8xf32>
    %96 = arith.truncf %95 : vector<2x8x8xf32> to vector<2x8x8xbf16>
    "tpu.trace_start"() <{level = 10 : i32, message = "bqk,bkf->bqf"}> : () -> ()
    %cst_30 = arith.constant dense<0.000000e+00> : vector<2x8x8xf32>
    %97 = tpu.matmul %96, %84, %cst_30 {dimension_numbers = #tpu.dot_dimension_numbers<[2], [1], [1], [2], [0, 0, 0, 1, 1, 2], [0], [0]>} : vector<2x8x8xbf16>, vector<2x8x8xbf16>, vector<2x8x8xf32> -> vector<2x8x8xf32>
    "tpu.trace_stop"() : () -> ()
    %98 = tpu.concatenate %49, %65, %81, %97 in 2 : vector<2x8x8xf32>, vector<2x8x8xf32>, vector<2x8x8xf32>, vector<2x8x8xf32> -> vector<2x8x32xf32>
    %99 = vector.shape_cast %98 : vector<2x8x32xf32> to vector<16x32xf32>
    %100 = arith.truncf %99 : vector<16x32xf32> to vector<16x32xbf16>
    %c0_31 = arith.constant 0 : index
    %c0_32 = arith.constant 0 : index
    %101 = vector.load %arg6[%c0_31, %c0_32] : memref<32x32xbf16, #tpu.memory_space<vmem>>, vector<32x32xbf16>
    %cst_33 = arith.constant dense<0.000000e+00> : vector<16x32xf32>
    %102 = tpu.matmul %100, %101, %cst_33 {dimension_numbers = #tpu.dot_dimension_numbers<[1], [0], [0], [1], [0, 0, 1, 1], [], []>} : vector<16x32xbf16>, vector<32x32xbf16>, vector<16x32xf32> -> vector<16x32xf32>
    %c0_34 = arith.constant 0 : index
    %c0_35 = arith.constant 0 : index
    %103 = vector.load %arg7[%c0_34, %c0_35] : memref<1x32xf32, #tpu.memory_space<vmem>>, vector<1x32xf32>
    %104 = vector.broadcast %103 : vector<1x32xf32> to vector<16x32xf32>
    %105 = arith.addf %102, %104 : vector<16x32xf32>
    %106 = arith.addf %105, %1 : vector<16x32xf32>
    %cst_36 = arith.constant dense<0.000000e+00> : vector<16xf32>
    %107 = vector.multi_reduction <add>, %106, %cst_36 [1] : vector<16x32xf32> to vector<16xf32>
    %108 = vector.shape_cast %107 : vector<16xf32> to vector<16x1xf32>
    %cst_37 = arith.constant 3.200000e+01 : f32
    %109 = vector.broadcast %cst_37 : f32 to vector<16x1xf32>
    %110 = arith.divf %108, %109 : vector<16x1xf32>
    %111 = vector.broadcast %110 : vector<16x1xf32> to vector<16x32xf32>
    %112 = arith.subf %106, %111 : vector<16x32xf32>
    %113 = arith.mulf %112, %112 : vector<16x32xf32>
    %cst_38 = arith.constant dense<0.000000e+00> : vector<16xf32>
    %114 = vector.multi_reduction <add>, %113, %cst_38 [1] : vector<16x32xf32> to vector<16xf32>
    %115 = vector.shape_cast %114 : vector<16xf32> to vector<16x1xf32>
    %cst_39 = arith.constant 3.200000e+01 : f32
    %116 = vector.broadcast %cst_39 : f32 to vector<16x1xf32>
    %117 = arith.divf %115, %116 : vector<16x1xf32>
    %118 = vector.broadcast %110 : vector<16x1xf32> to vector<16x32xf32>
    %119 = arith.subf %106, %118 : vector<16x32xf32>
    %cst_40 = arith.constant 9.99999974E-6 : f32
    %120 = vector.broadcast %cst_40 : f32 to vector<16x1xf32>
    %121 = arith.addf %117, %120 : vector<16x1xf32>
    %122 = math.rsqrt %121 : vector<16x1xf32>
    %123 = vector.broadcast %122 : vector<16x1xf32> to vector<16x32xf32>
    %124 = arith.mulf %119, %123 : vector<16x32xf32>
    %c0_41 = arith.constant 0 : index
    %c0_42 = arith.constant 0 : index
    %125 = vector.load %arg8[%c0_41, %c0_42] : memref<1x32xf32, #tpu.memory_space<vmem>>, vector<1x32xf32>
    %126 = vector.broadcast %125 : vector<1x32xf32> to vector<16x32xf32>
    %127 = arith.mulf %124, %126 : vector<16x32xf32>
    %c0_43 = arith.constant 0 : index
    %c0_44 = arith.constant 0 : index
    %128 = vector.load %arg9[%c0_43, %c0_44] : memref<1x32xf32, #tpu.memory_space<vmem>>, vector<1x32xf32>
    %129 = vector.broadcast %128 : vector<1x32xf32> to vector<16x32xf32>
    %130 = arith.addf %127, %129 : vector<16x32xf32>
    %131 = arith.truncf %130 : vector<16x32xf32> to vector<16x32xbf16>
    %c0_45 = arith.constant 0 : index
    %c0_46 = arith.constant 0 : index
    %132 = vector.load %arg10[%c0_45, %c0_46] : memref<32x32xbf16, #tpu.memory_space<vmem>>, vector<32x32xbf16>
    %cst_47 = arith.constant dense<0.000000e+00> : vector<16x32xf32>
    %133 = tpu.matmul %131, %132, %cst_47 {dimension_numbers = #tpu.dot_dimension_numbers<[1], [0], [0], [1], [0, 0, 1, 1], [], []>} : vector<16x32xbf16>, vector<32x32xbf16>, vector<16x32xf32> -> vector<16x32xf32>
    %c0_48 = arith.constant 0 : index
    %c0_49 = arith.constant 0 : index
    %134 = vector.load %arg11[%c0_48, %c0_49] : memref<1x32xf32, #tpu.memory_space<vmem>>, vector<1x32xf32>
    %135 = vector.broadcast %134 : vector<1x32xf32> to vector<16x32xf32>
    %136 = arith.addf %133, %135 : vector<16x32xf32>
    %cst_50 = arith.constant 0.000000e+00 : f32
    %137 = vector.broadcast %cst_50 : f32 to vector<16x32xf32>
    %138 = arith.maximumf %136, %137 : vector<16x32xf32>
    %139 = arith.truncf %138 : vector<16x32xf32> to vector<16x32xbf16>
    %c0_51 = arith.constant 0 : index
    %c0_52 = arith.constant 0 : index
    %140 = vector.load %arg12[%c0_51, %c0_52] : memref<32x32xbf16, #tpu.memory_space<vmem>>, vector<32x32xbf16>
    %cst_53 = arith.constant dense<0.000000e+00> : vector<16x32xf32>
    %141 = tpu.matmul %139, %140, %cst_53 {dimension_numbers = #tpu.dot_dimension_numbers<[1], [0], [0], [1], [0, 0, 1, 1], [], []>} : vector<16x32xbf16>, vector<32x32xbf16>, vector<16x32xf32> -> vector<16x32xf32>
    %c0_54 = arith.constant 0 : index
    %c0_55 = arith.constant 0 : index
    %142 = vector.load %arg13[%c0_54, %c0_55] : memref<1x32xf32, #tpu.memory_space<vmem>>, vector<1x32xf32>
    %143 = vector.broadcast %142 : vector<1x32xf32> to vector<16x32xf32>
    %144 = arith.addf %141, %143 : vector<16x32xf32>
    %145 = arith.addf %130, %144 : vector<16x32xf32>
    %146 = vector.shape_cast %145 : vector<16x32xf32> to vector<2x8x32xf32>
    %c0_56 = arith.constant 0 : index
    %c0_57 = arith.constant 0 : index
    %c0_58 = arith.constant 0 : index
    %147 = vector.load %arg14[%c0_56, %c0_57, %c0_58] : memref<2x8x32xf32, #tpu.memory_space<vmem>>, vector<2x8x32xf32>
    tpu.vector_store %arg14[%c0_56, %c0_57, %c0_58], %146 {strides = array<i32>} : memref<2x8x32xf32, #tpu.memory_space<vmem>>, vector<2x8x32xf32>,
    return
  }
  func.func @transform_0(%arg0: i32) -> (i32, i32, i32) {
    %c0_i32 = arith.constant 0 : i32
    %c0_i32_0 = arith.constant 0 : i32
    %c0_i32_1 = arith.constant 0 : i32
    %c0_i32_2 = arith.constant 0 : i32
    return %c0_i32, %c0_i32_0, %c0_i32_1 : i32, i32, i32
  }
  func.func @transform_1(%arg0: i32) -> (i32, i32) {
    %c0_i32 = arith.constant 0 : i32
    %c0_i32_0 = arith.constant 0 : i32
    %c0_i32_1 = arith.constant 0 : i32
    return %c0_i32, %c0_i32_0 : i32, i32
  }
  func.func @transform_2(%arg0: i32) -> (i32, i32) {
    %c0_i32 = arith.constant 0 : i32
    %c0_i32_0 = arith.constant 0 : i32
    %c0_i32_1 = arith.constant 0 : i32
    return %c0_i32, %c0_i32_0 : i32, i32
  }
  func.func @transform_3(%arg0: i32) -> (i32, i32) {
    %c0_i32 = arith.constant 0 : i32
    %c0_i32_0 = arith.constant 0 : i32
    %c0_i32_1 = arith.constant 0 : i32
    return %c0_i32, %c0_i32_0 : i32, i32
  }
  func.func @transform_4(%arg0: i32) -> (i32, i32) {
    %c0_i32 = arith.constant 0 : i32
    %c0_i32_0 = arith.constant 0 : i32
    %c0_i32_1 = arith.constant 0 : i32
    return %c0_i32, %c0_i32_0 : i32, i32
  }
  func.func @transform_5(%arg0: i32) -> (i32, i32) {
    %c0_i32 = arith.constant 0 : i32
    %c0_i32_0 = arith.constant 0 : i32
    %c0_i32_1 = arith.constant 0 : i32
    return %c0_i32, %c0_i32_0 : i32, i32
  }
  func.func @transform_6(%arg0: i32) -> (i32, i32) {
    %c0_i32 = arith.constant 0 : i32
    %c0_i32_0 = arith.constant 0 : i32
    %c0_i32_1 = arith.constant 0 : i32
    return %c0_i32, %c0_i32_0 : i32, i32
  }
  func.func @transform_7(%arg0: i32) -> (i32, i32) {
    %c0_i32 = arith.constant 0 : i32
    %c0_i32_0 = arith.constant 0 : i32
    %c0_i32_1 = arith.constant 0 : i32
    return %c0_i32, %c0_i32_0 : i32, i32
  }
  func.func @transform_8(%arg0: i32) -> (i32, i32) {
    %c0_i32 = arith.constant 0 : i32
    %c0_i32_0 = arith.constant 0 : i32
    %c0_i32_1 = arith.constant 0 : i32
    return %c0_i32, %c0_i32_0 : i32, i32
  }
  func.func @transform_9(%arg0: i32) -> (i32, i32) {
    %c0_i32 = arith.constant 0 : i32
    %c0_i32_0 = arith.constant 0 : i32
    %c0_i32_1 = arith.constant 0 : i32
    return %c0_i32, %c0_i32_0 : i32, i32
  }
  func.func @transform_10(%arg0: i32) -> (i32, i32) {
    %c0_i32 = arith.constant 0 : i32
    %c0_i32_0 = arith.constant 0 : i32
    %c0_i32_1 = arith.constant 0 : i32
    return %c0_i32, %c0_i32_0 : i32, i32
  }
  func.func @transform_11(%arg0: i32) -> (i32, i32) {
    %c0_i32 = arith.constant 0 : i32
    %c0_i32_0 = arith.constant 0 : i32
    %c0_i32_1 = arith.constant 0 : i32
    return %c0_i32, %c0_i32_0 : i32, i32
  }
  func.func @transform_12(%arg0: i32) -> (i32, i32) {
    %c0_i32 = arith.constant 0 : i32
    %c0_i32_0 = arith.constant 0 : i32
    %c0_i32_1 = arith.constant 0 : i32
    return %c0_i32, %c0_i32_0 : i32, i32
  }
  func.func @transform_13(%arg0: i32) -> (i32, i32, i32) {
    %c0_i32 = arith.constant 0 : i32
    %c0_i32_0 = arith.constant 0 : i32
    %c0_i32_1 = arith.constant 0 : i32
    %c0_i32_2 = arith.constant 0 : i32
    return %c0_i32, %c0_i32_0, %c0_i32_1 : i32, i32, i32
  }
}

</mosaic_0001>

<llo_original>
// kernel: tpu_custom_call.1
$region0: #{tpu_custom_call.1}
  #allocation0 [shape = 'u32[]', space=smem, size = 0x4, offset = 0x4, fixed_abs, tag = 'smem constant byte address 0x4 - core index']
  #allocation1 [shape = 'u32[72,128]{1,0:T(1,128)}', space=vmem, size = 0x9000, scoped, tag = 'internal scratch']
  %s0 = inlined_call_operand.hbm [shape: f32[2,8,32], index: 0, kind: input, shape index: {}]
  %s1 = inlined_call_operand.hbm [shape: f32[1,32], index: 1, kind: input, shape index: {}]
  %s2 = inlined_call_operand.vmem [shape: f32[1,32], index: 2, kind: input, shape index: {}]
  %s3 = inlined_call_operand.hbm [shape: bf16[32,96], index: 3, kind: input, shape index: {}]
  %s4 = inlined_call_operand.vmem [shape: f32[1,96], index: 4, kind: input, shape index: {}]
  %s5 = inlined_call_operand.hbm [shape: bf16[32,32], index: 5, kind: input, shape index: {}]
  %s6 = inlined_call_operand.vmem [shape: f32[1,32], index: 6, kind: input, shape index: {}]
  %s7 = inlined_call_operand.vmem [shape: f32[1,32], index: 7, kind: input, shape index: {}]
  %s8 = inlined_call_operand.vmem [shape: f32[1,32], index: 8, kind: input, shape index: {}]
  %s9 = inlined_call_operand.hbm [shape: bf16[32,32], index: 9, kind: input, shape index: {}]
  %s10 = inlined_call_operand.vmem [shape: f32[1,32], index: 10, kind: input, shape index: {}]
  %s11 = inlined_call_operand.hbm [shape: bf16[32,32], index: 11, kind: input, shape index: {}]
  %s12 = inlined_call_operand.vmem [shape: f32[1,32], index: 12, kind: input, shape index: {}]
  %s13 = inlined_call_operand.hbm [shape: f32[2,8,32], index: 13, kind: output, shape index: {}]
  %s14 = sld [smem:[#allocation0]]
  $region86: #{tpu_custom_call.1} parent=0
    _
  %s16 = ssub.s32 1, %s14
  %s17 = scalar_select 0, %s16, %s14
  $region1: #{tpu_custom_call.1} parent=0
    #allocation2 [shape = 'u8[8192]{0}', space=vmem, size = 0x2000, scoped, tag = 'input window, operand 0, single buffered']
    #allocation3 [shape = 's32[1]{0}', space=sflag, size = 0x4, scoped, tag = 'scoped memory for tpu_custom_call.1']
    #allocation4 [shape = 's32[1]{0}', space=sflag, size = 0x4, scoped, tag = 'scoped memory for tpu_custom_call.1']
    #allocation5 [shape = 'u8[512]{0}', space=vmem, size = 0x400, scoped, tag = 'input window, operand 1, single buffered']
    #allocation6 [shape = 's32[1]{0}', space=sflag, size = 0x4, scoped, tag = 'scoped memory for tpu_custom_call.1']
    #allocation7 [shape = 'u8[8192]{0}', space=vmem, size = 0x2000, scoped, tag = 'input window, operand 3, single buffered']
    #allocation8 [shape = 'u8[8192]{0}', space=vmem, size = 0x2000, scoped, tag = 'input window, operand 5, single buffered']
    #allocation9 [shape = 's32[1]{0}', space=sflag, size = 0x4, scoped, tag = 'scoped memory for tpu_custom_call.1']
    #allocation10 [shape = 'u8[8192]{0}', space=vmem, size = 0x2000, scoped, tag = 'input window, operand 9, single buffered']
    #allocation11 [shape = 'u8[8192]{0}', space=vmem, size = 0x2000, scoped, tag = 'input window, operand 11, single buffered']
    #allocation12 [shape = 's32[1]{0}', space=sflag, size = 0x4, scoped, tag = 'scoped memory for tpu_custom_call.1']
    #allocation13 [shape = 'u8[8192]{0}', space=vmem, size = 0x2000, scoped, tag = 'output window, operand 0, single buffered']
    %18 = vsyncpa [#allocation3], 0
    %19 = vsyncpa [#allocation6], 0
    %20 = vsyncpa [#allocation9], 0
    %21 = vsyncpa [#allocation12], 0
    %22 = vsyncpa [#allocation4], 0
    // Predicated region
    $region2: #{tpu_custom_call.1} parent=1 // pred_check
      _
    $region3: #{tpu_custom_call.1} parent=1 // pred_check_branch
      %24 = sbr.rel (0) target = $region5
    $region4: #{tpu_custom_call.1} parent=1 // pred_region
      %26 = vsyncadd [#allocation3], 0
      %s27 = sshll.u32 %s0, 4
      %s28 = int_to_ptr.hbm [resolvable:$true] %s27
      %s29 = sshll.u32 [#allocation2], 4
      %s30 = int_to_ptr.vmem [resolvable:$true] %s29
      %35 = dma.hbm_to_vmem [thread:$0]  %s28, 256, %s30, [#allocation3], 128, 128, 8
    $region5: #{tpu_custom_call.1} parent=1 // pred_fallthru
      _
    // Predicated region
    $region6: #{tpu_custom_call.1} parent=1 // pred_check
      _
    $region7: #{tpu_custom_call.1} parent=1 // pred_check_branch
      %37 = sbr.rel (0) target = $region9
    $region8: #{tpu_custom_call.1} parent=1 // pred_region
      %39 = vsyncadd [#allocation6], 0
      %s41 = sshll.u32 %s1, 4
      %s42 = int_to_ptr.hbm [resolvable:$true] %s41
      %s43 = sshll.u32 [#allocation5], 4
      %s44 = int_to_ptr.vmem [resolvable:$true] %s43
      %46 = dma.hbm_to_vmem [thread:$0]  %s42, 16, %s44, [#allocation6]
    $region9: #{tpu_custom_call.1} parent=1 // pred_fallthru
      _
    // Predicated region
    $region10: #{tpu_custom_call.1} parent=1 // pred_check
      _
    $region11: #{tpu_custom_call.1} parent=1 // pred_check_branch
      %48 = sbr.rel (0) target = $region13
    $region12: #{tpu_custom_call.1} parent=1 // pred_region
      _
    $region13: #{tpu_custom_call.1} parent=1 // pred_fallthru
      _
    // Predicated region
    $region14: #{tpu_custom_call.1} parent=1 // pred_check
      _
    $region15: #{tpu_custom_call.1} parent=1 // pred_check_branch
      %50 = sbr.rel (0) target = $region17
    $region16: #{tpu_custom_call.1} parent=1 // pred_region
      %52 = vsyncadd [#allocation6], 0
      %s53 = sshll.u32 %s3, 4
      %s54 = int_to_ptr.hbm [resolvable:$true] %s53
      %s55 = sshll.u32 [#allocation7], 4
      %s56 = int_to_ptr.vmem [resolvable:$true] %s55
      %61 = dma.hbm_to_vmem [thread:$0]  %s54, 256, %s56, [#allocation6], 64, 64, 4
    $region17: #{tpu_custom_call.1} parent=1 // pred_fallthru
      _
    // Predicated region
    $region18: #{tpu_custom_call.1} parent=1 // pred_check
      _
    $region19: #{tpu_custom_call.1} parent=1 // pred_check_branch
      %63 = sbr.rel (0) target = $region21
    $region20: #{tpu_custom_call.1} parent=1 // pred_region
      _
    $region21: #{tpu_custom_call.1} parent=1 // pred_fallthru
      _
    // Predicated region
    $region22: #{tpu_custom_call.1} parent=1 // pred_check
      _
    $region23: #{tpu_custom_call.1} parent=1 // pred_check_branch
      %65 = sbr.rel (0) target = $region25
    $region24: #{tpu_custom_call.1} parent=1 // pred_region
      %67 = vsyncadd [#allocation9], 0
      %s68 = sshll.u32 %s5, 4
      %s69 = int_to_ptr.hbm [resolvable:$true] %s68
      %s70 = sshll.u32 [#allocation8], 4
      %s71 = int_to_ptr.vmem [resolvable:$true] %s70
      %76 = dma.hbm_to_vmem [thread:$0]  %s69, 256, %s71, [#allocation9], 64, 64, 4
    $region25: #{tpu_custom_call.1} parent=1 // pred_fallthru
      _
    // Predicated region
    $region26: #{tpu_custom_call.1} parent=1 // pred_check
      _
    $region27: #{tpu_custom_call.1} parent=1 // pred_check_branch
      %78 = sbr.rel (0) target = $region29
    $region28: #{tpu_custom_call.1} parent=1 // pred_region
      _
    $region29: #{tpu_custom_call.1} parent=1 // pred_fallthru
      _
    // Predicated region
    $region30: #{tpu_custom_call.1} parent=1 // pred_check
      _
    $region31: #{tpu_custom_call.1} parent=1 // pred_check_branch
      %80 = sbr.rel (0) target = $region33
    $region32: #{tpu_custom_call.1} parent=1 // pred_region
      _
    $region33: #{tpu_custom_call.1} parent=1 // pred_fallthru
      _
    // Predicated region
    $region34: #{tpu_custom_call.1} parent=1 // pred_check
      _
    $region35: #{tpu_custom_call.1} parent=1 // pred_check_branch
      %82 = sbr.rel (0) target = $region37
    $region36: #{tpu_custom_call.1} parent=1 // pred_region
      _
    $region37: #{tpu_custom_call.1} parent=1 // pred_fallthru
      _
    // Predicated region
    $region38: #{tpu_custom_call.1} parent=1 // pred_check
      _
    $region39: #{tpu_custom_call.1} parent=1 // pred_check_branch
      %84 = sbr.rel (0) target = $region41
    $region40: #{tpu_custom_call.1} parent=1 // pred_region
      %86 = vsyncadd [#allocation9], 0
      %s87 = sshll.u32 %s9, 4
      %s88 = int_to_ptr.hbm [resolvable:$true] %s87
      %s89 = sshll.u32 [#allocation10], 4
      %s90 = int_to_ptr.vmem [resolvable:$true] %s89
      %95 = dma.hbm_to_vmem [thread:$0]  %s88, 256, %s90, [#allocation9], 64, 64, 4
    $region41: #{tpu_custom_call.1} parent=1 // pred_fallthru
      _
    // Predicated region
    $region42: #{tpu_custom_call.1} parent=1 // pred_check
      _
    $region43: #{tpu_custom_call.1} parent=1 // pred_check_branch
      %97 = sbr.rel (0) target = $region45
    $region44: #{tpu_custom_call.1} parent=1 // pred_region
      _
    $region45: #{tpu_custom_call.1} parent=1 // pred_fallthru
      _
    // Predicated region
    $region46: #{tpu_custom_call.1} parent=1 // pred_check
      _
    $region47: #{tpu_custom_call.1} parent=1 // pred_check_branch
      %99 = sbr.rel (0) target = $region49
    $region48: #{tpu_custom_call.1} parent=1 // pred_region
      %101 = vsyncadd [#allocation12], 0
      %s102 = sshll.u32 %s11, 4
      %s103 = int_to_ptr.hbm [resolvable:$true] %s102
      %s104 = sshll.u32 [#allocation11], 4
      %s105 = int_to_ptr.vmem [resolvable:$true] %s104
      %110 = dma.hbm_to_vmem [thread:$0]  %s103, 256, %s105, [#allocation12], 64, 64, 4
    $region49: #{tpu_custom_call.1} parent=1 // pred_fallthru
      _
    // Predicated region
    $region50: #{tpu_custom_call.1} parent=1 // pred_check
      _
    $region51: #{tpu_custom_call.1} parent=1 // pred_check_branch
      %112 = sbr.rel (0) target = $region53
    $region52: #{tpu_custom_call.1} parent=1 // pred_region
      _
    $region53: #{tpu_custom_call.1} parent=1 // pred_fallthru
      _
    // Predicated region
    $region54: #{tpu_custom_call.1} parent=1 // pred_check
      _
    $region55: #{tpu_custom_call.1} parent=1 // pred_check_branch
      %114 = sbr.rel (0) target = $region57
    $region56: #{tpu_custom_call.1} parent=1 // pred_region
      %116 = dma.done [#allocation3], 256
    $region57: #{tpu_custom_call.1} parent=1 // pred_fallthru
      _
    // Predicated region
    $region58: #{tpu_custom_call.1} parent=1 // pred_check
      _
    $region59: #{tpu_custom_call.1} parent=1 // pred_check_branch
      %118 = sbr.rel (0) target = $region61
    $region60: #{tpu_custom_call.1} parent=1 // pred_region
      %120 = dma.done [#allocation6], 16
    $region61: #{tpu_custom_call.1} parent=1 // pred_fallthru
      _
    // Predicated region
    $region62: #{tpu_custom_call.1} parent=1 // pred_check
      _
    $region63: #{tpu_custom_call.1} parent=1 // pred_check_branch
      %122 = sbr.rel (0) target = $region65
    $region64: #{tpu_custom_call.1} parent=1 // pred_region
      %124 = dma.done [#allocation6], 256
    $region65: #{tpu_custom_call.1} parent=1 // pred_fallthru
      _
    // Predicated region
    $region66: #{tpu_custom_call.1} parent=1 // pred_check
      _
    $region67: #{tpu_custom_call.1} parent=1 // pred_check_branch
      %126 = sbr.rel (0) target = $region69
    $region68: #{tpu_custom_call.1} parent=1 // pred_region
      %128 = dma.done [#allocation9], 256
    $region69: #{tpu_custom_call.1} parent=1 // pred_fallthru
      _
    // Predicated region
    $region70: #{tpu_custom_call.1} parent=1 // pred_check
      _
    $region71: #{tpu_custom_call.1} parent=1 // pred_check_branch
      %130 = sbr.rel (0) target = $region73
    $region72: #{tpu_custom_call.1} parent=1 // pred_region
      %132 = dma.done [#allocation9], 256
    $region73: #{tpu_custom_call.1} parent=1 // pred_fallthru
      _
    // Predicated region
    $region74: #{tpu_custom_call.1} parent=1 // pred_check
      _
    $region75: #{tpu_custom_call.1} parent=1 // pred_check_branch
      %134 = sbr.rel (0) target = $region77
    $region76: #{tpu_custom_call.1} parent=1 // pred_region
      %136 = dma.done [#allocation12], 256
    $region77: #{tpu_custom_call.1} parent=1 // pred_fallthru
      _
    %v138 = vld [vmem:[#allocation2] sm:$0xff]
    %v139 = vld [vmem:[#allocation2 + $0x8] sm:$0xff]
    %vm140 = vcmask 261120
    %v141 = vsel %vm140, %v138, 0.0
    %142 = vadd.xlane.f32.xlu0 %v141
    %v143 = vpop.xlane.xlu0 %142
    %v144 = vsel %vm140, %v139, 0.0
    %145 = vadd.xlane.f32.xlu0 %v144
    %v146 = vpop.xlane.xlu0 %145
    %v147 = vrcp.pop 32.0
    %v148 = vmul.f32 32.0, %v147
    %v149 = vsub.f32 1.0, %v148
    %v150 = vmul.f32 %v147, %v149
    %v151 = vadd.f32 %v147, %v150
    %vm152 = vweird.f32 %v147
    %v153 = vsel %vm152, %v147, %v151
    %v154 = vmul.f32 %v143, %v153
    %v155 = vmul.f32 %v146, %v153
    %v156 = vsub.f32 %v138, %v154
    %v157 = vsub.f32 %v139, %v155
    %v158 = vmul.f32 %v156, %v156
    %v159 = vmul.f32 %v157, %v157
    %v160 = vsel %vm140, %v158, 0.0
    %161 = vadd.xlane.f32.xlu0 %v160
    %v162 = vpop.xlane.xlu0 %161
    %v163 = vsel %vm140, %v159, 0.0
    %164 = vadd.xlane.f32.xlu0 %v163
    %v165 = vpop.xlane.xlu0 %164
    %v166 = vmul.f32 %v162, %v153
    %v167 = vmul.f32 %v165, %v153
    %v168 = vadd.f32 %v166, 1e-05
    %v169 = vadd.f32 %v167, 1e-05
    %v170 = vrsqrt.pop %v168
    %v171 = vmul.f32 %v170, %v168
    %v172 = vmul.f32 %v171, %v170
    %v173 = vmul.f32 0.5, %v172
    %v174 = vsub.f32 1.5, %v173
    %v175 = vmul.f32 %v170, %v174
    %vm176 = vweird.f32 %v168
    %vm177 = vweird.f32 %v170
    %vm178 = vmor %vm176, %vm177
    %v179 = vsel %vm178, %v170, %v175
    %v180 = vrsqrt.pop %v169
    %v181 = vmul.f32 %v180, %v169
    %v182 = vmul.f32 %v181, %v180
    %v183 = vmul.f32 0.5, %v182
    %v184 = vsub.f32 1.5, %v183
    %v185 = vmul.f32 %v180, %v184
    %vm186 = vweird.f32 %v169
    %vm187 = vweird.f32 %v180
    %vm188 = vmor %vm186, %vm187
    %v189 = vsel %vm188, %v180, %v185
    %v190 = vmul.f32 %v156, %v179
    %v191 = vmul.f32 %v157, %v189
    %v192 = vld [vmem:[#allocation5] sm:$0x1]
    %v194 = vperm.slane %v192, 0
    %v196 = vmul.f32 %v190, %v194
    %v197 = vmul.f32 %v191, %v194
    %v198 = vld [vmem:[%s2] sm:$0x1]
    %v200 = vperm.slane %v198, 0
    %v202 = vadd.f32 %v196, %v200
    %v203 = vadd.f32 %v197, %v200
    %v204 = vpack.c.bf16 %v203, %v202
    %v205 = vld [vmem:[#allocation7] sm:$0xf]
    %v206 = vld [vmem:[#allocation7 + $0x4] sm:$0xf]
    %v207 = vld [vmem:[#allocation7 + $0x8] sm:$0xf]
    %v208 = vld [vmem:[#allocation7 + $0xc] sm:$0xf]
    %v209 = vld [vmem:[%s4] sm:$0x1]
    %v211 = vperm.slane %v209, 0
    %v217 = vunpack.c.l.b16 %v205
    %v218 = vunpack.c.l.b16 %v206
    %v219 = vunpack.c.l.b16 %v207
    %v220 = vunpack.c.l.b16 %v208
    %v221 = vpack.c.b16 %v218, %v217
    %v222 = vpack.c.b16 %v220, %v219
    %v226 = vsel %vm140, %v204, 0
    %228 = vmatpush.bf16.msra.mxu0 0
    %229 = vmatpush.bf16.msra.mxu0 0
    %230 = vmatpush.bf16.msra.mxu0 0
    %231 = vmatpush.bf16.msra.mxu0 0
    %232 = vmatpush.bf16.msra.mxu0 0
    %233 = vmatpush.bf16.msra.mxu0 0
    %234 = vmatpush.bf16.msra.mxu0 %v222
    %235 = vmatpush.bf16.msra.mxu0 %v221
    %236 = vmatmul.bf16.gmra.mxu0 %v226
    %v237 = vpop.f32.mrf.mxu0
    %v238 = vadd.f32 %v211, %v237
    %v239 = vpop.f32.mrf.mxu0
    %v240 = vadd.f32 %v211, %v239
    %241 = vdwg.mxu0
    %v242 = vpack.c.bf16 %v238, %v238
    %v243 = vpack.c.bf16 %v240, %v240
    %v245 = vunpack.c.l.b16 %v242
    %v246 = vpack.c.b16 %v245, %v245
    %247 = vrot.lane.b32.xlu0 %v246, 96
    %v248 = vpop.permute.xlu0 %247
    %vm249 = vcmask 64512
    %v251 = vsel %vm249, %v242, 0
    %v254 = vsel %vm249, %v248, 0
    %256 = vmatpush.bf16.xpose.msra.mxu0 0
    %257 = vmatpush.bf16.xpose.msra.mxu0 0
    %258 = vmatpush.bf16.xpose.msra.mxu0 0
    %259 = vmatpush.bf16.xpose.msra.mxu0 0
    %260 = vmatpush.bf16.xpose.msra.mxu0 0
    %261 = vmatpush.bf16.xpose.msra.mxu0 0
    %262 = vmatpush.bf16.xpose.msra.mxu0 0
    %263 = vmatpush.bf16.xpose.msra.mxu0 %v254
    %264 = vmatmul.bf16.gmra.mxu0 %v251
    %v265 = vpop.f32.mrf.mxu0
    %v266 = vadd.f32 0.0, %v265
    %v267 = vpop.f32.mrf.mxu0
    %268 = vdwg.mxu0
    %v270 = vunpack.c.l.b16 %v243
    %v271 = vpack.c.b16 %v270, %v270
    %272 = vrot.lane.b32.xlu0 %v271, 96
    %v273 = vpop.permute.xlu0 %272
    %v275 = vsel %vm249, %v243, 0
    %v278 = vsel %vm249, %v273, 0
    %280 = vmatpush.bf16.xpose.msra.mxu0 0
    %281 = vmatpush.bf16.xpose.msra.mxu0 0
    %282 = vmatpush.bf16.xpose.msra.mxu0 0
    %283 = vmatpush.bf16.xpose.msra.mxu0 0
    %284 = vmatpush.bf16.xpose.msra.mxu0 0
    %285 = vmatpush.bf16.xpose.msra.mxu0 0
    %286 = vmatpush.bf16.xpose.msra.mxu0 0
    %287 = vmatpush.bf16.xpose.msra.mxu0 %v278
    %288 = vmatmul.bf16.gmra.mxu0 %v275
    %v289 = vpop.f32.mrf.mxu0
    %v290 = vadd.f32 0.0, %v289
    %v291 = vpop.f32.mrf.mxu0
    %292 = vdwg.mxu0
    %v293 = vsel %vm249, %v266, -inf
    %294 = vmax.xlane.f32.xlu0 %v293
    %v295 = vpop.xlane.xlu0 %294
    %v296 = vsel %vm249, %v290, -inf
    %297 = vmax.xlane.f32.xlu0 %v296
    %v298 = vpop.xlane.xlu0 %297
    %v299 = vsub.f32 %v266, %v295
    %v300 = vsub.f32 %v290, %v298
    %v301 = vmul.f32 %v299, 1.442695
    %v302 = vpow.pop %v301
    %v303 = vmul.f32 %v300, 1.442695
    %v304 = vpow.pop %v303
    %v305 = vsel %vm249, %v302, 0.0
    %306 = vadd.xlane.f32.xlu0 %v305
    %v307 = vpop.xlane.xlu0 %306
    %v308 = vsel %vm249, %v304, 0.0
    %309 = vadd.xlane.f32.xlu0 %v308
    %v310 = vpop.xlane.xlu0 %309
    %v311 = vrcp.pop %v307
    %v312 = vrcp.pop %v310
    %v313 = vmul.f32 %v302, %v311
    %v314 = vmul.f32 %v304, %v312
    %v315 = vpack.c.bf16 %v313, %v313
    %v316 = vpack.c.bf16 %v314, %v314
    %317 = vrot.lane.b32.xlu0 %v246, 64
    %v318 = vpop.permute.xlu0 %317
    %v320 = vsel %vm249, %v315, 0
    %vm322 = vcmask 1043456
    %v324 = vsel %vm322, %v318, 0
    %326 = vmatpush.bf16.msra.mxu0 0
    %327 = vmatpush.bf16.msra.mxu0 0
    %328 = vmatpush.bf16.msra.mxu0 0
    %329 = vmatpush.bf16.msra.mxu0 0
    %330 = vmatpush.bf16.msra.mxu0 0
    %331 = vmatpush.bf16.msra.mxu0 0
    %332 = vmatpush.bf16.msra.mxu0 0
    %333 = vmatpush.bf16.msra.mxu0 %v324
    %334 = vmatmul.bf16.gmra.mxu0 %v320
    %v335 = vpop.f32.mrf.mxu0
    %v336 = vadd.f32 0.0, %v335
    %v337 = vpop.f32.mrf.mxu0
    %338 = vdwg.mxu0
    %339 = vrot.lane.b32.xlu0 %v271, 64
    %v340 = vpop.permute.xlu0 %339
    %v342 = vsel %vm249, %v316, 0
    %v345 = vsel %vm322, %v340, 0
    %347 = vmatpush.bf16.msra.mxu0 0
    %348 = vmatpush.bf16.msra.mxu0 0
    %349 = vmatpush.bf16.msra.mxu0 0
    %350 = vmatpush.bf16.msra.mxu0 0
    %351 = vmatpush.bf16.msra.mxu0 0
    %352 = vmatpush.bf16.msra.mxu0 0
    %353 = vmatpush.bf16.msra.mxu0 0
    %354 = vmatpush.bf16.msra.mxu0 %v345
    %355 = vmatmul.bf16.gmra.mxu0 %v342
    %v356 = vpop.f32.mrf.mxu0
    %v357 = vadd.f32 0.0, %v356
    %v358 = vpop.f32.mrf.mxu0
    %359 = vdwg.mxu0
    %360 = vrot.lane.b32.xlu0 %v246, 120
    %v361 = vpop.permute.xlu0 %360
    %362 = vrot.lane.b32.xlu0 %v246, 88
    %v363 = vpop.permute.xlu0 %362
    %v365 = vsel %vm249, %v361, 0
    %v368 = vsel %vm249, %v363, 0
    %370 = vmatpush.bf16.xpose.msra.mxu0 0
    %371 = vmatpush.bf16.xpose.msra.mxu0 0
    %372 = vmatpush.bf16.xpose.msra.mxu0 0
    %373 = vmatpush.bf16.xpose.msra.mxu0 0
    %374 = vmatpush.bf16.xpose.msra.mxu0 0
    %375 = vmatpush.bf16.xpose.msra.mxu0 0
    %376 = vmatpush.bf16.xpose.msra.mxu0 0
    %377 = vmatpush.bf16.xpose.msra.mxu0 %v368
    %378 = vmatmul.bf16.gmra.mxu0 %v365
    %v379 = vpop.f32.mrf.mxu0
    %v380 = vadd.f32 0.0, %v379
    %v381 = vpop.f32.mrf.mxu0
    %382 = vdwg.mxu0
    %383 = vrot.lane.b32.xlu0 %v271, 120
    %v384 = vpop.permute.xlu0 %383
    %385 = vrot.lane.b32.xlu0 %v271, 88
    %v386 = vpop.permute.xlu0 %385
    %v388 = vsel %vm249, %v384, 0
    %v391 = vsel %vm249, %v386, 0
    %393 = vmatpush.bf16.xpose.msra.mxu0 0
    %394 = vmatpush.bf16.xpose.msra.mxu0 0
    %395 = vmatpush.bf16.xpose.msra.mxu0 0
    %396 = vmatpush.bf16.xpose.msra.mxu0 0
    %397 = vmatpush.bf16.xpose.msra.mxu0 0
    %398 = vmatpush.bf16.xpose.msra.mxu0 0
    %399 = vmatpush.bf16.xpose.msra.mxu0 0
    %400 = vmatpush.bf16.xpose.msra.mxu0 %v391
    %401 = vmatmul.bf16.gmra.mxu0 %v388
    %v402 = vpop.f32.mrf.mxu0
    %v403 = vadd.f32 0.0, %v402
    %v404 = vpop.f32.mrf.mxu0
    %405 = vdwg.mxu0
    %v406 = vsel %vm249, %v380, -inf
    %407 = vmax.xlane.f32.xlu0 %v406
    %v408 = vpop.xlane.xlu0 %407
    %v409 = vsel %vm249, %v403, -inf
    %410 = vmax.xlane.f32.xlu0 %v409
    %v411 = vpop.xlane.xlu0 %410
    %v412 = vsub.f32 %v380, %v408
    %v413 = vsub.f32 %v403, %v411
    %v414 = vmul.f32 %v412, 1.442695
    %v415 = vpow.pop %v414
    %v416 = vmul.f32 %v413, 1.442695
    %v417 = vpow.pop %v416
    %v418 = vsel %vm249, %v415, 0.0
    %419 = vadd.xlane.f32.xlu0 %v418
    %v420 = vpop.xlane.xlu0 %419
    %v421 = vsel %vm249, %v417, 0.0
    %422 = vadd.xlane.f32.xlu0 %v421
    %v423 = vpop.xlane.xlu0 %422
    %v424 = vrcp.pop %v420
    %v425 = vrcp.pop %v423
    %v426 = vmul.f32 %v415, %v424
    %v427 = vmul.f32 %v417, %v425
    %v428 = vpack.c.bf16 %v426, %v426
    %v429 = vpack.c.bf16 %v427, %v427
    %430 = vrot.lane.b32.xlu0 %v246, 56
    %v431 = vpop.permute.xlu0 %430
    %v433 = vsel %vm249, %v428, 0
    %v436 = vsel %vm322, %v431, 0
    %438 = vmatpush.bf16.msra.mxu0 0
    %439 = vmatpush.bf16.msra.mxu0 0
    %440 = vmatpush.bf16.msra.mxu0 0
    %441 = vmatpush.bf16.msra.mxu0 0
    %442 = vmatpush.bf16.msra.mxu0 0
    %443 = vmatpush.bf16.msra.mxu0 0
    %444 = vmatpush.bf16.msra.mxu0 0
    %445 = vmatpush.bf16.msra.mxu0 %v436
    %446 = vmatmul.bf16.gmra.mxu0 %v433
    %v447 = vpop.f32.mrf.mxu0
    %v448 = vadd.f32 0.0, %v447
    %v449 = vpop.f32.mrf.mxu0
    %450 = vdwg.mxu0
    %451 = vrot.lane.b32.xlu0 %v271, 56
    %v452 = vpop.permute.xlu0 %451
    %v454 = vsel %vm249, %v429, 0
    %v457 = vsel %vm322, %v452, 0
    %459 = vmatpush.bf16.msra.mxu0 0
    %460 = vmatpush.bf16.msra.mxu0 0
    %461 = vmatpush.bf16.msra.mxu0 0
    %462 = vmatpush.bf16.msra.mxu0 0
    %463 = vmatpush.bf16.msra.mxu0 0
    %464 = vmatpush.bf16.msra.mxu0 0
    %465 = vmatpush.bf16.msra.mxu0 0
    %466 = vmatpush.bf16.msra.mxu0 %v457
    %467 = vmatmul.bf16.gmra.mxu0 %v454
    %v468 = vpop.f32.mrf.mxu0
    %v469 = vadd.f32 0.0, %v468
    %v470 = vpop.f32.mrf.mxu0
    %471 = vdwg.mxu0
    %472 = vrot.lane.b32.xlu0 %v246, 112
    %v473 = vpop.permute.xlu0 %472
    %474 = vrot.lane.b32.xlu0 %v246, 80
    %v475 = vpop.permute.xlu0 %474
    %v477 = vsel %vm249, %v473, 0
    %v480 = vsel %vm249, %v475, 0
    %482 = vmatpush.bf16.xpose.msra.mxu0 0
    %483 = vmatpush.bf16.xpose.msra.mxu0 0
    %484 = vmatpush.bf16.xpose.msra.mxu0 0
    %485 = vmatpush.bf16.xpose.msra.mxu0 0
    %486 = vmatpush.bf16.xpose.msra.mxu0 0
    %487 = vmatpush.bf16.xpose.msra.mxu0 0
    %488 = vmatpush.bf16.xpose.msra.mxu0 0
    %489 = vmatpush.bf16.xpose.msra.mxu0 %v480
    %490 = vmatmul.bf16.gmra.mxu0 %v477
    %v491 = vpop.f32.mrf.mxu0
    %v492 = vadd.f32 0.0, %v491
    %v493 = vpop.f32.mrf.mxu0
    %494 = vdwg.mxu0
    %495 = vrot.lane.b32.xlu0 %v271, 112
    %v496 = vpop.permute.xlu0 %495
    %497 = vrot.lane.b32.xlu0 %v271, 80
    %v498 = vpop.permute.xlu0 %497
    %v500 = vsel %vm249, %v496, 0
    %v503 = vsel %vm249, %v498, 0
    %505 = vmatpush.bf16.xpose.msra.mxu0 0
    %506 = vmatpush.bf16.xpose.msra.mxu0 0
    %507 = vmatpush.bf16.xpose.msra.mxu0 0
    %508 = vmatpush.bf16.xpose.msra.mxu0 0
    %509 = vmatpush.bf16.xpose.msra.mxu0 0
    %510 = vmatpush.bf16.xpose.msra.mxu0 0
    %511 = vmatpush.bf16.xpose.msra.mxu0 0
    %512 = vmatpush.bf16.xpose.msra.mxu0 %v503
    %513 = vmatmul.bf16.gmra.mxu0 %v500
    %v514 = vpop.f32.mrf.mxu0
    %v515 = vadd.f32 0.0, %v514
    %v516 = vpop.f32.mrf.mxu0
    %517 = vdwg.mxu0
    %v518 = vsel %vm249, %v492, -inf
    %519 = vmax.xlane.f32.xlu0 %v518
    %v520 = vpop.xlane.xlu0 %519
    %v521 = vsel %vm249, %v515, -inf
    %522 = vmax.xlane.f32.xlu0 %v521
    %v523 = vpop.xlane.xlu0 %522
    %v524 = vsub.f32 %v492, %v520
    %v525 = vsub.f32 %v515, %v523
    %v526 = vmul.f32 %v524, 1.442695
    %v527 = vpow.pop %v526
    %v528 = vmul.f32 %v525, 1.442695
    %v529 = vpow.pop %v528
    %v530 = vsel %vm249, %v527, 0.0
    %531 = vadd.xlane.f32.xlu0 %v530
    %v532 = vpop.xlane.xlu0 %531
    %v533 = vsel %vm249, %v529, 0.0
    %534 = vadd.xlane.f32.xlu0 %v533
    %v535 = vpop.xlane.xlu0 %534
    %v536 = vrcp.pop %v532
    %v537 = vrcp.pop %v535
    %v538 = vmul.f32 %v527, %v536
    %v539 = vmul.f32 %v529, %v537
    %v540 = vpack.c.bf16 %v538, %v538
    %v541 = vpack.c.bf16 %v539, %v539
    %542 = vrot.lane.b32.xlu0 %v246, 48
    %v543 = vpop.permute.xlu0 %542
    %v545 = vsel %vm249, %v540, 0
    %v548 = vsel %vm322, %v543, 0
    %550 = vmatpush.bf16.msra.mxu0 0
    %551 = vmatpush.bf16.msra.mxu0 0
    %552 = vmatpush.bf16.msra.mxu0 0
    %553 = vmatpush.bf16.msra.mxu0 0
    %554 = vmatpush.bf16.msra.mxu0 0
    %555 = vmatpush.bf16.msra.mxu0 0
    %556 = vmatpush.bf16.msra.mxu0 0
    %557 = vmatpush.bf16.msra.mxu0 %v548
    %558 = vmatmul.bf16.gmra.mxu0 %v545
    %v559 = vpop.f32.mrf.mxu0
    %v560 = vadd.f32 0.0, %v559
    %v561 = vpop.f32.mrf.mxu0
    %562 = vdwg.mxu0
    %563 = vrot.lane.b32.xlu0 %v271, 48
    %v564 = vpop.permute.xlu0 %563
    %v566 = vsel %vm249, %v541, 0
    %v569 = vsel %vm322, %v564, 0
    %571 = vmatpush.bf16.msra.mxu0 0
    %572 = vmatpush.bf16.msra.mxu0 0
    %573 = vmatpush.bf16.msra.mxu0 0
    %574 = vmatpush.bf16.msra.mxu0 0
    %575 = vmatpush.bf16.msra.mxu0 0
    %576 = vmatpush.bf16.msra.mxu0 0
    %577 = vmatpush.bf16.msra.mxu0 0
    %578 = vmatpush.bf16.msra.mxu0 %v569
    %579 = vmatmul.bf16.gmra.mxu0 %v566
    %v580 = vpop.f32.mrf.mxu0
    %v581 = vadd.f32 0.0, %v580
    %v582 = vpop.f32.mrf.mxu0
    %583 = vdwg.mxu0
    %584 = vrot.lane.b32.xlu0 %v246, 104
    %v585 = vpop.permute.xlu0 %584
    %586 = vrot.lane.b32.xlu0 %v246, 72
    %v587 = vpop.permute.xlu0 %586
    %v589 = vsel %vm249, %v585, 0
    %v592 = vsel %vm249, %v587, 0
    %594 = vmatpush.bf16.xpose.msra.mxu0 0
    %595 = vmatpush.bf16.xpose.msra.mxu0 0
    %596 = vmatpush.bf16.xpose.msra.mxu0 0
    %597 = vmatpush.bf16.xpose.msra.mxu0 0
    %598 = vmatpush.bf16.xpose.msra.mxu0 0
    %599 = vmatpush.bf16.xpose.msra.mxu0 0
    %600 = vmatpush.bf16.xpose.msra.mxu0 0
    %601 = vmatpush.bf16.xpose.msra.mxu0 %v592
    %602 = vmatmul.bf16.gmra.mxu0 %v589
    %v603 = vpop.f32.mrf.mxu0
    %v604 = vadd.f32 0.0, %v603
    %v605 = vpop.f32.mrf.mxu0
    %606 = vdwg.mxu0
    %607 = vrot.lane.b32.xlu0 %v271, 104
    %v608 = vpop.permute.xlu0 %607
    %609 = vrot.lane.b32.xlu0 %v271, 72
    %v610 = vpop.permute.xlu0 %609
    %v612 = vsel %vm249, %v608, 0
    %v615 = vsel %vm249, %v610, 0
    %617 = vmatpush.bf16.xpose.msra.mxu0 0
    %618 = vmatpush.bf16.xpose.msra.mxu0 0
    %619 = vmatpush.bf16.xpose.msra.mxu0 0
    %620 = vmatpush.bf16.xpose.msra.mxu0 0
    %621 = vmatpush.bf16.xpose.msra.mxu0 0
    %622 = vmatpush.bf16.xpose.msra.mxu0 0
    %623 = vmatpush.bf16.xpose.msra.mxu0 0
    %624 = vmatpush.bf16.xpose.msra.mxu0 %v615
    %625 = vmatmul.bf16.gmra.mxu0 %v612
    %v626 = vpop.f32.mrf.mxu0
    %v627 = vadd.f32 0.0, %v626
    %v628 = vpop.f32.mrf.mxu0
    %629 = vdwg.mxu0
    %v630 = vsel %vm249, %v604, -inf
    %631 = vmax.xlane.f32.xlu0 %v630
    %v632 = vpop.xlane.xlu0 %631
    %v633 = vsel %vm249, %v627, -inf
    %634 = vmax.xlane.f32.xlu0 %v633
    %v635 = vpop.xlane.xlu0 %634
    %v636 = vsub.f32 %v604, %v632
    %v637 = vsub.f32 %v627, %v635
    %v638 = vmul.f32 %v636, 1.442695
    %v639 = vpow.pop %v638
    %v640 = vmul.f32 %v637, 1.442695
    %v641 = vpow.pop %v640
    %v642 = vsel %vm249, %v639, 0.0
    %643 = vadd.xlane.f32.xlu0 %v642
    %v644 = vpop.xlane.xlu0 %643
    %v645 = vsel %vm249, %v641, 0.0
    %646 = vadd.xlane.f32.xlu0 %v645
    %v647 = vpop.xlane.xlu0 %646
    %v648 = vrcp.pop %v644
    %v649 = vrcp.pop %v647
    %v650 = vmul.f32 %v639, %v648
    %v651 = vmul.f32 %v641, %v649
    %v652 = vpack.c.bf16 %v650, %v650
    %v653 = vpack.c.bf16 %v651, %v651
    %654 = vrot.lane.b32.xlu0 %v246, 40
    %v655 = vpop.permute.xlu0 %654
    %v657 = vsel %vm249, %v652, 0
    %v660 = vsel %vm322, %v655, 0
    %662 = vmatpush.bf16.msra.mxu0 0
    %663 = vmatpush.bf16.msra.mxu0 0
    %664 = vmatpush.bf16.msra.mxu0 0
    %665 = vmatpush.bf16.msra.mxu0 0
    %666 = vmatpush.bf16.msra.mxu0 0
    %667 = vmatpush.bf16.msra.mxu0 0
    %668 = vmatpush.bf16.msra.mxu0 0
    %669 = vmatpush.bf16.msra.mxu0 %v660
    %670 = vmatmul.bf16.gmra.mxu0 %v657
    %v671 = vpop.f32.mrf.mxu0
    %v672 = vadd.f32 0.0, %v671
    %v673 = vpop.f32.mrf.mxu0
    %674 = vdwg.mxu0
    %675 = vrot.lane.b32.xlu0 %v271, 40
    %v676 = vpop.permute.xlu0 %675
    %v678 = vsel %vm249, %v653, 0
    %v681 = vsel %vm322, %v676, 0
    %683 = vmatpush.bf16.msra.mxu0 0
    %684 = vmatpush.bf16.msra.mxu0 0
    %685 = vmatpush.bf16.msra.mxu0 0
    %686 = vmatpush.bf16.msra.mxu0 0
    %687 = vmatpush.bf16.msra.mxu0 0
    %688 = vmatpush.bf16.msra.mxu0 0
    %689 = vmatpush.bf16.msra.mxu0 0
    %690 = vmatpush.bf16.msra.mxu0 %v681
    %691 = vmatmul.bf16.gmra.mxu0 %v678
    %v692 = vpop.f32.mrf.mxu0
    %v693 = vadd.f32 0.0, %v692
    %v694 = vpop.f32.mrf.mxu0
    %695 = vdwg.mxu0
    %698 = vrot.lane.b32.xlu0 %v448, 8
    %v699 = vpop.permute.xlu0 %698
    %700 = vrot.lane.b32.xlu0 %v469, 8
    %v701 = vpop.permute.xlu0 %700
    %706 = vrot.lane.b32.xlu0 %v560, 16
    %v707 = vpop.permute.xlu0 %706
    %708 = vrot.lane.b32.xlu0 %v581, 16
    %v709 = vpop.permute.xlu0 %708
    %714 = vrot.lane.b32.xlu0 %v672, 24
    %v715 = vpop.permute.xlu0 %714
    %716 = vrot.lane.b32.xlu0 %v693, 24
    %v717 = vpop.permute.xlu0 %716
    %v720 = vsel %vm249, %v336, %v699
    %v721 = vsel %vm249, %v357, %v701
    %vm722 = vcmask 130048
    %v723 = vsel %vm722, %v720, %v707
    %v724 = vsel %vm722, %v721, %v709
    %vm725 = vcmask 195584
    %v726 = vsel %vm725, %v723, %v715
    %v727 = vsel %vm725, %v724, %v717
    %v728 = vpack.c.bf16 %v727, %v726
    %v729 = vld [vmem:[#allocation8] sm:$0xf]
    %v730 = vld [vmem:[#allocation8 + $0x4] sm:$0xf]
    %v731 = vld [vmem:[#allocation8 + $0x8] sm:$0xf]
    %v732 = vld [vmem:[#allocation8 + $0xc] sm:$0xf]
    %v733 = vld [vmem:[%s6] sm:$0x1]
    %v735 = vperm.slane %v733, 0
    %v741 = vunpack.c.l.b16 %v729
    %v742 = vunpack.c.l.b16 %v730
    %v743 = vunpack.c.l.b16 %v731
    %v744 = vunpack.c.l.b16 %v732
    %v745 = vpack.c.b16 %v742, %v741
    %v746 = vpack.c.b16 %v744, %v743
    %v750 = vsel %vm140, %v728, 0
    %752 = vmatpush.bf16.msra.mxu0 0
    %753 = vmatpush.bf16.msra.mxu0 0
    %754 = vmatpush.bf16.msra.mxu0 0
    %755 = vmatpush.bf16.msra.mxu0 0
    %756 = vmatpush.bf16.msra.mxu0 0
    %757 = vmatpush.bf16.msra.mxu0 0
    %758 = vmatpush.bf16.msra.mxu0 %v746
    %759 = vmatpush.bf16.msra.mxu0 %v745
    %760 = vmatmul.bf16.gmra.mxu0 %v750
    %v761 = vpop.f32.mrf.mxu0
    %v762 = vadd.f32 %v735, %v761
    %v763 = vpop.f32.mrf.mxu0
    %v764 = vadd.f32 %v735, %v763
    %765 = vdwg.mxu0
    %v766 = vadd.f32 %v762, %v138
    %v767 = vadd.f32 %v764, %v139
    %v768 = vsel %vm140, %v766, 0.0
    %769 = vadd.xlane.f32.xlu0 %v768
    %v770 = vpop.xlane.xlu0 %769
    %v771 = vsel %vm140, %v767, 0.0
    %772 = vadd.xlane.f32.xlu0 %v771
    %v773 = vpop.xlane.xlu0 %772
    %v774 = vmul.f32 %v770, %v153
    %v775 = vmul.f32 %v773, %v153
    %v776 = vsub.f32 %v766, %v774
    %v777 = vsub.f32 %v767, %v775
    %v778 = vmul.f32 %v776, %v776
    %v779 = vmul.f32 %v777, %v777
    %v780 = vsel %vm140, %v778, 0.0
    %781 = vadd.xlane.f32.xlu0 %v780
    %v782 = vpop.xlane.xlu0 %781
    %v783 = vsel %vm140, %v779, 0.0
    %784 = vadd.xlane.f32.xlu0 %v783
    %v785 = vpop.xlane.xlu0 %784
    %v786 = vmul.f32 %v782, %v153
    %v787 = vmul.f32 %v785, %v153
    %v788 = vadd.f32 %v786, 1e-05
    %v789 = vadd.f32 %v787, 1e-05
    %v790 = vrsqrt.pop %v788
    %v791 = vmul.f32 %v790, %v788
    %v792 = vmul.f32 %v791, %v790
    %v793 = vmul.f32 0.5, %v792
    %v794 = vsub.f32 1.5, %v793
    %v795 = vmul.f32 %v790, %v794
    %vm796 = vweird.f32 %v788
    %vm797 = vweird.f32 %v790
    %vm798 = vmor %vm796, %vm797
    %v799 = vsel %vm798, %v790, %v795
    %v800 = vrsqrt.pop %v789
    %v801 = vmul.f32 %v800, %v789
    %v802 = vmul.f32 %v801, %v800
    %v803 = vmul.f32 0.5, %v802
    %v804 = vsub.f32 1.5, %v803
    %v805 = vmul.f32 %v800, %v804
    %vm806 = vweird.f32 %v789
    %vm807 = vweird.f32 %v800
    %vm808 = vmor %vm806, %vm807
    %v809 = vsel %vm808, %v800, %v805
    %v810 = vmul.f32 %v776, %v799
    %v811 = vmul.f32 %v777, %v809
    %v812 = vld [vmem:[%s7] sm:$0x1]
    %v814 = vperm.slane %v812, 0
    %v816 = vmul.f32 %v810, %v814
    %v817 = vmul.f32 %v811, %v814
    %v818 = vld [vmem:[%s8] sm:$0x1]
    %v820 = vperm.slane %v818, 0
    %v822 = vadd.f32 %v816, %v820
    %v823 = vadd.f32 %v817, %v820
    %v824 = vpack.c.bf16 %v823, %v822
    %v825 = vld [vmem:[#allocation10] sm:$0xf]
    %v826 = vld [vmem:[#allocation10 + $0x4] sm:$0xf]
    %v827 = vld [vmem:[#allocation10 + $0x8] sm:$0xf]
    %v828 = vld [vmem:[#allocation10 + $0xc] sm:$0xf]
    %v829 = vld [vmem:[%s10] sm:$0x1]
    %v831 = vperm.slane %v829, 0
    %v837 = vunpack.c.l.b16 %v825
    %v838 = vunpack.c.l.b16 %v826
    %v839 = vunpack.c.l.b16 %v827
    %v840 = vunpack.c.l.b16 %v828
    %v841 = vpack.c.b16 %v838, %v837
    %v842 = vpack.c.b16 %v840, %v839
    %v846 = vsel %vm140, %v824, 0
    %848 = vmatpush.bf16.msra.mxu0 0
    %849 = vmatpush.bf16.msra.mxu0 0
    %850 = vmatpush.bf16.msra.mxu0 0
    %851 = vmatpush.bf16.msra.mxu0 0
    %852 = vmatpush.bf16.msra.mxu0 0
    %853 = vmatpush.bf16.msra.mxu0 0
    %854 = vmatpush.bf16.msra.mxu0 %v842
    %855 = vmatpush.bf16.msra.mxu0 %v841
    %856 = vmatmul.bf16.gmra.mxu0 %v846
    %v857 = vpop.f32.mrf.mxu0
    %v858 = vadd.f32 %v831, %v857
    %v859 = vpop.f32.mrf.mxu0
    %v860 = vadd.f32 %v831, %v859
    %861 = vdwg.mxu0
    %v862 = vmax.f32 %v858, 0.0
    %v863 = vmax.f32 %v860, 0.0
    %v864 = vpack.c.bf16 %v863, %v862
    %v865 = vld [vmem:[#allocation11] sm:$0xf]
    %v866 = vld [vmem:[#allocation11 + $0x4] sm:$0xf]
    %v867 = vld [vmem:[#allocation11 + $0x8] sm:$0xf]
    %v868 = vld [vmem:[#allocation11 + $0xc] sm:$0xf]
    %v869 = vld [vmem:[%s12] sm:$0x1]
    %v871 = vperm.slane %v869, 0
    %v877 = vunpack.c.l.b16 %v865
    %v878 = vunpack.c.l.b16 %v866
    %v879 = vunpack.c.l.b16 %v867
    %v880 = vunpack.c.l.b16 %v868
    %v881 = vpack.c.b16 %v878, %v877
    %v882 = vpack.c.b16 %v880, %v879
    %v886 = vsel %vm140, %v864, 0
    %888 = vmatpush.bf16.msra.mxu0 0
    %889 = vmatpush.bf16.msra.mxu0 0
    %890 = vmatpush.bf16.msra.mxu0 0
    %891 = vmatpush.bf16.msra.mxu0 0
    %892 = vmatpush.bf16.msra.mxu0 0
    %893 = vmatpush.bf16.msra.mxu0 0
    %894 = vmatpush.bf16.msra.mxu0 %v882
    %895 = vmatpush.bf16.msra.mxu0 %v881
    %896 = vmatmul.bf16.gmra.mxu0 %v886
    %v897 = vpop.f32.mrf.mxu0
    %v898 = vadd.f32 %v871, %v897
    %v899 = vpop.f32.mrf.mxu0
    %v900 = vadd.f32 %v871, %v899
    %901 = vdwg.mxu0
    %v902 = vadd.f32 %v822, %v898
    %v903 = vadd.f32 %v823, %v900
    %904 = vst.msk [vmem:[#allocation13] sm:$0xff] %vm140, %v902
    %905 = vst.msk [vmem:[#allocation13 + $0x8] sm:$0xff] %vm140, %v903
    // Predicated region
    $region78: #{tpu_custom_call.1} parent=1 // pred_check
      _
    $region79: #{tpu_custom_call.1} parent=1 // pred_check_branch
      %907 = sbr.rel (0) target = $region81
    $region80: #{tpu_custom_call.1} parent=1 // pred_region
      %909 = vsyncadd [#allocation4], 0
      %s910 = sshll.u32 [#allocation13], 4
      %s911 = int_to_ptr.vmem [resolvable:$true] %s910
      %s912 = sshll.u32 %s13, 4
      %s913 = int_to_ptr.hbm [resolvable:$true] %s912
      %918 = dma.vmem_to_hbm [thread:$0]  %s911, 256, %s913, [#allocation4], 128, 128, 8
    $region81: #{tpu_custom_call.1} parent=1 // pred_fallthru
      _
    // Predicated region
    $region82: #{tpu_custom_call.1} parent=1 // pred_check
      _
    $region83: #{tpu_custom_call.1} parent=1 // pred_check_branch
      %920 = sbr.rel (0) target = $region85
    $region84: #{tpu_custom_call.1} parent=1 // pred_region
      %922 = dma.done [#allocation4], 256
    $region85: #{tpu_custom_call.1} parent=1 // pred_fallthru
      _
    %923 = vsyncpa [#allocation3], 1
    %924 = vsyncpa [#allocation6], 1
    %925 = vsyncpa [#allocation9], 1
    %926 = vsyncpa [#allocation12], 1
    %927 = vsyncpa [#allocation4], 1

</llo_original>
